<compile_context>
chip_gen: v6e
topology: v6e:2x2x1
jax: 0.10.0
libtpu: 0.0.40
codegen_flags: <defaults>
</compile_context>

<pallas_src>
import jax
import jax.numpy as jnp
from jax import lax
from jax.experimental import pallas as pl
from jax.experimental.pallas import tpu as pltpu

# Module hyper-parameters (from the PyTorch source).
batch_size = 1
hidden_size = 5
input_size = 5
num_classes = 5
num_layers = 1
seq_len = 1


def _rnn_kernel(x_ref, h0_ref, w_ihT_ref, w_hhT_ref, b_ref, out_ref, hn_ref):
    """Single-layer Elman RNN, batch_first, B=1 squeezed.

    x_ref    : (T, I)     time-major input
    h0_ref   : (L, B, H)  initial hidden state (L = B = 1)
    w_ihT_ref: (I, H)     W_ih^T
    w_hhT_ref: (H, H)     W_hh^T
    b_ref    : (1, H)     b_ih + b_hh (pre-added once at init)
    out_ref  : (T, H)     all hidden states == module `out.view(-1, num_classes)`
    hn_ref   : (L, B, H)  final hidden state
    """
    n_steps = out_ref.shape[0]

    # Hoisted input projection for every timestep (one parallel matmul), staged
    # straight into the output buffer which the recurrence then overwrites.
    out_ref[...] = (
        jnp.dot(x_ref[...], w_ihT_ref[...], preferred_element_type=jnp.float32)
        + b_ref[...]
    )

    w_hhT = w_hhT_ref[...]

    def step(t, h):
        # h: (1, H). Serial critical path: tiny K=H recurrent dot + tanh.
        xp_t = out_ref[pl.ds(t, 1), :]
        h_new = jnp.tanh(
            xp_t + jnp.dot(h, w_hhT, preferred_element_type=jnp.float32))
        out_ref[pl.ds(t, 1), :] = h_new
        return h_new

    h_last = lax.fori_loop(0, n_steps, step, h0_ref[0], unroll=min(n_steps, 8))
    hn_ref[0] = h_last  # h_n emitted by the kernel -> no wrapper-side slice


def pack_params(w_ih, w_hh, b_ih, b_hh):
    """One-time packing of PyTorch-layout nn.RNN params into kernel layout."""
    w_ihT = jnp.asarray(w_ih, jnp.float32).T                      # (I, H)
    w_hhT = jnp.asarray(w_hh, jnp.float32).T                      # (H, H)
    b = (jnp.asarray(b_ih, jnp.float32)
         + jnp.asarray(b_hh, jnp.float32))[None, :]               # (1, H)
    return w_ihT, w_hhT, b


def rnn_forward_pallas(x_tI, hidden_lbh, w_ihT, w_hhT, b):
    T, _ = x_tI.shape
    H = w_hhT.shape[0]
    vmem = pl.BlockSpec(memory_space=pltpu.MemorySpace.VMEM)
    out, hn = pl.pallas_call(
        _rnn_kernel,
        out_shape=(
            jax.ShapeDtypeStruct((T, H), jnp.float32),             # out (B*T, C)
            jax.ShapeDtypeStruct(hidden_lbh.shape, jnp.float32),   # h_n (L, B, H)
        ),
        in_specs=[vmem, vmem, vmem, vmem, vmem],
        out_specs=(vmem, vmem),
    )(x_tI, hidden_lbh, w_ihT, w_hhT, b)
    return out, hn


def model_forward(hidden, x, kernel_params):
    """Replicates Model.forward(hidden, x) -> (hidden, out).

    With batch_size == 1, x.view(B, T, I) in time-major squeezed form is simply
    (T, I) == x, so the kernel consumes / produces the caller-facing shapes
    directly and the wrapper adds no layout HLOs around the pallas_call.
    """
    w_ihT, w_hhT, b = kernel_params
    x = x.reshape(batch_size * seq_len, input_size)   # x.view(...); B == 1
    out, hn = rnn_forward_pallas(x, hidden, w_ihT, w_hhT, b)
    # out is already (B*T, num_classes); hn is already (num_layers, B, H).
    return hn, out


def init_params(key):
    # PyTorch nn.RNN init: U(-1/sqrt(H), 1/sqrt(H)) for all weights & biases.
    k = 1.0 / jnp.sqrt(jnp.float32(hidden_size))
    k1, k2, k3, k4 = jax.random.split(key, 4)
    w_ih = jax.random.uniform(k1, (hidden_size, input_size), jnp.float32, -k, k)
    w_hh = jax.random.uniform(k2, (hidden_size, hidden_size), jnp.float32, -k, k)
    b_ih = jax.random.uniform(k3, (hidden_size,), jnp.float32, -k, k)
    b_hh = jax.random.uniform(k4, (hidden_size,), jnp.float32, -k, k)
    return w_ih, w_hh, b_ih, b_hh


def init_hidden():
    return jnp.zeros((num_layers, batch_size, hidden_size), jnp.float32)


if __name__ == "__main__":
    key = jax.random.PRNGKey(0)
    kp, kx = jax.random.split(key)
    w_ih, w_hh, b_ih, b_hh = init_params(kp)
    kernel_params = pack_params(w_ih, w_hh, b_ih, b_hh)

    x = jax.random.normal(kx, (batch_size * seq_len, input_size), jnp.float32)
    hidden = init_hidden()

    new_hidden, out = jax.jit(model_forward)(hidden, x, kernel_params)
    jax.block_until_ready((new_hidden, out))

    # Reference: plain-JAX Elman RNN with the raw PyTorch-layout weights.
    x_r = x.reshape(batch_size, seq_len, input_size)
    h = hidden[0]
    outs = []
    for t in range(seq_len):
        h = jnp.tanh(x_r[:, t, :] @ w_ih.T + h @ w_hh.T + b_ih + b_hh)
        outs.append(h)
    out_ref = jnp.stack(outs, axis=1).reshape(-1, num_classes)

    assert out.shape == (batch_size * seq_len, num_classes)
    assert new_hidden.shape == (num_layers, batch_size, hidden_size)
    assert jnp.allclose(out, out_ref, atol=1e-5), "output mismatch"
    assert jnp.allclose(new_hidden[0], h, atol=1e-5), "hidden mismatch"

    print("KERNEL_OK")
</pallas_src>

<mosaic_0001>
module attributes {stable_mosaic.version = 11 : i64} {
  func.func @_rnn_kernel(%arg0: memref<1x5xf32, #tpu.memory_space<vmem>>, %arg1: memref<1x1x5xf32, #tpu.memory_space<vmem>>, %arg2: memref<5x5xf32, #tpu.memory_space<vmem>>, %arg3: memref<5x5xf32, #tpu.memory_space<vmem>>, %arg4: memref<1x5xf32, #tpu.memory_space<vmem>>, %arg5: memref<1x5xf32, #tpu.memory_space<vmem>>, %arg6: memref<1x1x5xf32, #tpu.memory_space<vmem>>) attributes {dimension_semantics = [], scalar_prefetch = 0 : i64, scratch_operands = 0 : i64, tpu.core_type = #tpu.core_type<tc>} {
    %c0 = arith.constant 0 : index
    %c0_0 = arith.constant 0 : index
    %0 = vector.load %arg0[%c0, %c0_0] : memref<1x5xf32, #tpu.memory_space<vmem>>, vector<1x5xf32>
    %c0_1 = arith.constant 0 : index
    %c0_2 = arith.constant 0 : index
    %1 = vector.load %arg2[%c0_1, %c0_2] : memref<5x5xf32, #tpu.memory_space<vmem>>, vector<5x5xf32>
    %cst = arith.constant dense<0.000000e+00> : vector<1x5xf32>
    %2 = tpu.matmul %0, %1, %cst {dimension_numbers = #tpu.dot_dimension_numbers<[1], [0], [0], [1], [0, 0, 1, 1], [], []>} : vector<1x5xf32>, vector<5x5xf32>, vector<1x5xf32> -> vector<1x5xf32>
    %c0_3 = arith.constant 0 : index
    %c0_4 = arith.constant 0 : index
    %3 = vector.load %arg4[%c0_3, %c0_4] : memref<1x5xf32, #tpu.memory_space<vmem>>, vector<1x5xf32>
    %4 = arith.addf %2, %3 : vector<1x5xf32>
    %c0_5 = arith.constant 0 : index
    %c0_6 = arith.constant 0 : index
    %5 = vector.load %arg5[%c0_5, %c0_6] : memref<1x5xf32, #tpu.memory_space<vmem>>, vector<1x5xf32>
    tpu.vector_store %arg5[%c0_5, %c0_6], %4 {strides = array<i32>} : memref<1x5xf32, #tpu.memory_space<vmem>>, vector<1x5xf32>,
    %c0_7 = arith.constant 0 : index
    %c0_8 = arith.constant 0 : index
    %6 = vector.load %arg3[%c0_7, %c0_8] : memref<5x5xf32, #tpu.memory_space<vmem>>, vector<5x5xf32>
    %c0_9 = arith.constant 0 : index
    %c0_10 = arith.constant 0 : index
    %c0_11 = arith.constant 0 : index
    %7 = vector.load %arg1[%c0_9, %c0_10, %c0_11] : memref<1x1x5xf32, #tpu.memory_space<vmem>>, vector<1x1x5xf32>
    %8 = vector.shape_cast %7 : vector<1x1x5xf32> to vector<1x5xf32>
    %c0_i32 = arith.constant 0 : i32
    %9 = arith.index_cast %c0_i32 : i32 to index
    %c0_12 = arith.constant 0 : index
    %10 = vector.load %arg5[%9, %c0_12] : memref<1x5xf32, #tpu.memory_space<vmem>>, vector<1x5xf32>
    %cst_13 = arith.constant dense<0.000000e+00> : vector<1x5xf32>
    %11 = tpu.matmul %8, %6, %cst_13 {dimension_numbers = #tpu.dot_dimension_numbers<[1], [0], [0], [1], [0, 0, 1, 1], [], []>} : vector<1x5xf32>, vector<5x5xf32>, vector<1x5xf32> -> vector<1x5xf32>
    %12 = arith.addf %10, %11 : vector<1x5xf32>
    %13 = math.tanh %12 : vector<1x5xf32>
    %14 = arith.index_cast %c0_i32 : i32 to index
    %c0_14 = arith.constant 0 : index
    %15 = vector.load %arg5[%14, %c0_14] : memref<1x5xf32, #tpu.memory_space<vmem>>, vector<1x5xf32>
    tpu.vector_store %arg5[%14, %c0_14], %13 {strides = array<i32>} : memref<1x5xf32, #tpu.memory_space<vmem>>, vector<1x5xf32>,
    %c1_i32 = arith.constant 1 : i32
    %c0_15 = arith.constant 0 : index
    %c0_16 = arith.constant 0 : index
    %c0_17 = arith.constant 0 : index
    %16 = vector.load %arg6[%c0_15, %c0_16, %c0_17] : memref<1x1x5xf32, #tpu.memory_space<vmem>>, vector<1x1x5xf32>
    %17 = vector.shape_cast %16 : vector<1x1x5xf32> to vector<1x5xf32>
    %18 = vector.shape_cast %13 : vector<1x5xf32> to vector<1x1x5xf32>
    tpu.vector_store %arg6[%c0_15, %c0_16, %c0_17], %18 {strides = array<i32>} : memref<1x1x5xf32, #tpu.memory_space<vmem>>, vector<1x1x5xf32>,
    return
  }
}

</mosaic_0001>

<llo_original>
// kernel: model_forward.1
$region0: #{model_forward.1}
  #allocation0 [shape = 'u32[]', space=smem, size = 0x4, offset = 0x4, fixed_abs, tag = 'smem constant byte address 0x4 - core index']
  #allocation1 [shape = 'u32[144,128]{1,0:T(1,128)}', space=vmem, size = 0x12000, scoped, tag = 'internal scratch']
  %s0 = inlined_call_operand.vmem [shape: f32[1,5], index: 0, kind: input, shape index: {}]
  %s1 = inlined_call_operand.hbm [shape: f32[1,1,5], index: 1, kind: input, shape index: {}]
  %s2 = inlined_call_operand.hbm [shape: f32[5,5], index: 2, kind: input, shape index: {}]
  %s3 = inlined_call_operand.hbm [shape: f32[5,5], index: 3, kind: input, shape index: {}]
  %s4 = inlined_call_operand.vmem [shape: f32[1,5], index: 4, kind: input, shape index: {}]
  %s5 = inlined_call_operand.hbm [shape: f32[1,5], index: 5, kind: output, shape index: {0}]
  %s6 = inlined_call_operand.hbm [shape: f32[1,1,5], index: 6, kind: output, shape index: {1}]
  %7 = xla_tuple %s5, %s6
  %s8 = sld [smem:[#allocation0]]
  $region50: #{model_forward.1} parent=0
    _
  %s10 = ssub.s32 1, %s8
  %s11 = scalar_select 0, %s10, %s8
  $region1: #{model_forward.1} parent=0
    #allocation2 [shape = 'u8[512]{0}', space=vmem, size = 0x400, scoped, tag = 'input window, operand 1, single buffered']
    #allocation3 [shape = 's32[1]{0}', space=sflag, size = 0x4, scoped, tag = 'scoped memory for model_forward.1']
    #allocation4 [shape = 's32[1]{0}', space=sflag, size = 0x4, scoped, tag = 'scoped memory for model_forward.1']
    #allocation5 [shape = 'u8[4096]{0}', space=vmem, size = 0x1000, scoped, tag = 'input window, operand 2, single buffered']
    #allocation6 [shape = 's32[1]{0}', space=sflag, size = 0x4, scoped, tag = 'scoped memory for model_forward.1']
    #allocation7 [shape = 'u8[4096]{0}', space=vmem, size = 0x1000, scoped, tag = 'input window, operand 3, single buffered']
    #allocation8 [shape = 'u8[512]{0}', space=vmem, size = 0x400, scoped, tag = 'output window, operand 0, single buffered']
    #allocation9 [shape = 'u8[512]{0}', space=vmem, size = 0x400, scoped, tag = 'output window, operand 1, single buffered']
    #allocation10 [shape = 's32[1]{0}', space=sflag, size = 0x4, scoped, tag = 'scoped memory for model_forward.1']
    %12 = vsyncpa [#allocation3], 0
    %13 = vsyncpa [#allocation6], 0
    %14 = vsyncpa [#allocation4], 0
    %15 = vsyncpa [#allocation10], 0
    // Predicated region
    $region2: #{model_forward.1} parent=1 // pred_check
      _
    $region3: #{model_forward.1} parent=1 // pred_check_branch
      %17 = sbr.rel (0) target = $region5
    $region4: #{model_forward.1} parent=1 // pred_region
      _
    $region5: #{model_forward.1} parent=1 // pred_fallthru
      _
    // Predicated region
    $region6: #{model_forward.1} parent=1 // pred_check
      _
    $region7: #{model_forward.1} parent=1 // pred_check_branch
      %19 = sbr.rel (0) target = $region9
    $region8: #{model_forward.1} parent=1 // pred_region
      %s21 = ssub.s32 16, 16
      %22 = vsyncadd [#allocation3], %s21
      %s24 = sshll.u32 [#allocation2], 4
      %s25 = int_to_ptr.vmem [resolvable:$true] %s24
      %27 = dma.hbm_to_vmem [thread:$0]  %s1, 16, %s25, [#allocation3]
    $region9: #{model_forward.1} parent=1 // pred_fallthru
      _
    // Predicated region
    $region10: #{model_forward.1} parent=1 // pred_check
      _
    $region11: #{model_forward.1} parent=1 // pred_check_branch
      %29 = sbr.rel (0) target = $region13
    $region12: #{model_forward.1} parent=1 // pred_region
      %s31 = ssub.s32 128, 128
      %32 = vsyncadd [#allocation6], %s31
      %s34 = sshll.u32 [#allocation5], 4
      %s35 = int_to_ptr.vmem [resolvable:$true] %s34
      %37 = dma.hbm_to_vmem [thread:$0]  %s2, 128, %s35, [#allocation6]
    $region13: #{model_forward.1} parent=1 // pred_fallthru
      _
    // Predicated region
    $region14: #{model_forward.1} parent=1 // pred_check
      _
    $region15: #{model_forward.1} parent=1 // pred_check_branch
      %39 = sbr.rel (0) target = $region17
    $region16: #{model_forward.1} parent=1 // pred_region
      %s41 = ssub.s32 128, 128
      %42 = vsyncadd [#allocation6], %s41
      %s44 = sshll.u32 [#allocation7], 4
      %s45 = int_to_ptr.vmem [resolvable:$true] %s44
      %47 = dma.hbm_to_vmem [thread:$0]  %s3, 128, %s45, [#allocation6]
    $region17: #{model_forward.1} parent=1 // pred_fallthru
      _
    // Predicated region
    $region18: #{model_forward.1} parent=1 // pred_check
      _
    $region19: #{model_forward.1} parent=1 // pred_check_branch
      %49 = sbr.rel (0) target = $region21
    $region20: #{model_forward.1} parent=1 // pred_region
      _
    $region21: #{model_forward.1} parent=1 // pred_fallthru
      _
    // Predicated region
    $region22: #{model_forward.1} parent=1 // pred_check
      _
    $region23: #{model_forward.1} parent=1 // pred_check_branch
      %51 = sbr.rel (0) target = $region25
    $region24: #{model_forward.1} parent=1 // pred_region
      %52 = dma.done [#allocation3], 16
    $region25: #{model_forward.1} parent=1 // pred_fallthru
      _
    // Predicated region
    $region26: #{model_forward.1} parent=1 // pred_check
      _
    $region27: #{model_forward.1} parent=1 // pred_check_branch
      %54 = sbr.rel (0) target = $region29
    $region28: #{model_forward.1} parent=1 // pred_region
      %55 = dma.done [#allocation6], 128
    $region29: #{model_forward.1} parent=1 // pred_fallthru
      _
    // Predicated region
    $region30: #{model_forward.1} parent=1 // pred_check
      _
    $region31: #{model_forward.1} parent=1 // pred_check_branch
      %57 = sbr.rel (0) target = $region33
    $region32: #{model_forward.1} parent=1 // pred_region
      %58 = dma.done [#allocation6], 128
    $region33: #{model_forward.1} parent=1 // pred_fallthru
      _
    %v59 = vld [vmem:[%s0] sm:$0x1]
    %v60 = vld [vmem:[#allocation5] sm:$0x1f]
    %v61 = vld [vmem:[%s4] sm:$0x1]
    %vm62 = vcmask 39936
    %v64 = vsel %vm62, %v59, 0
    %vm66 = vcmask 1044480
    %v68 = vsel %vm66, %v60, 0
    %70 = vmatprep.subr.mxu0 0.0
    %71 = vmatpush1.msra.mxu0 0.0
    %72 = vmatprep.subr.mxu0 0.0
    %73 = vmatpush1.msra.mxu0 0.0
    %74 = vmatprep.subr.mxu0 0.0
    %75 = vmatpush1.msra.mxu0 0.0
    %76 = vmatprep.subr.mxu0 0.0
    %77 = vmatpush1.msra.mxu0 0.0
    %78 = vmatprep.subr.mxu0 0.0
    %79 = vmatpush1.msra.mxu0 0.0
    %80 = vmatprep.subr.mxu0 0.0
    %81 = vmatpush1.msra.mxu0 0.0
    %82 = vmatprep.subr.mxu0 0.0
    %83 = vmatpush1.msra.mxu0 0.0
    %84 = vmatprep.subr.mxu0 0.0
    %85 = vmatpush1.msra.mxu0 0.0
    %86 = vmatprep.subr.mxu0 0.0
    %87 = vmatpush1.msra.mxu0 0.0
    %88 = vmatprep.subr.mxu0 0.0
    %89 = vmatpush1.msra.mxu0 0.0
    %90 = vmatprep.subr.mxu0 0.0
    %91 = vmatpush1.msra.mxu0 0.0
    %92 = vmatprep.subr.mxu0 0.0
    %93 = vmatpush1.msra.mxu0 0.0
    %94 = vmatprep.subr.mxu0 0.0
    %95 = vmatpush1.msra.mxu0 0.0
    %96 = vmatprep.subr.mxu0 0.0
    %97 = vmatpush1.msra.mxu0 0.0
    %98 = vmatprep.subr.mxu0 0.0
    %99 = vmatpush1.msra.mxu0 0.0
    %100 = vmatprep.subr.mxu0 0.0
    %101 = vmatpush1.msra.mxu0 %v68
    %102 = vmatprep.subr.mxu0 0.0
    %103 = vmatpush2.msra.mxu0 0.0
    %104 = vmatprep.subr.mxu0 0.0
    %105 = vmatpush2.msra.mxu0 0.0
    %106 = vmatprep.subr.mxu0 0.0
    %107 = vmatpush2.msra.mxu0 0.0
    %108 = vmatprep.subr.mxu0 0.0
    %109 = vmatpush2.msra.mxu0 0.0
    %110 = vmatprep.subr.mxu0 0.0
    %111 = vmatpush2.msra.mxu0 0.0
    %112 = vmatprep.subr.mxu0 0.0
    %113 = vmatpush2.msra.mxu0 0.0
    %114 = vmatprep.subr.mxu0 0.0
    %115 = vmatpush2.msra.mxu0 0.0
    %116 = vmatprep.subr.mxu0 0.0
    %117 = vmatpush2.msra.mxu0 0.0
    %118 = vmatprep.subr.mxu0 0.0
    %119 = vmatpush2.msra.mxu0 0.0
    %120 = vmatprep.subr.mxu0 0.0
    %121 = vmatpush2.msra.mxu0 0.0
    %122 = vmatprep.subr.mxu0 0.0
    %123 = vmatpush2.msra.mxu0 0.0
    %124 = vmatprep.subr.mxu0 0.0
    %125 = vmatpush2.msra.mxu0 0.0
    %126 = vmatprep.subr.mxu0 0.0
    %127 = vmatpush2.msra.mxu0 0.0
    %128 = vmatprep.subr.mxu0 0.0
    %129 = vmatpush2.msra.mxu0 0.0
    %130 = vmatprep.subr.mxu0 0.0
    %131 = vmatpush2.msra.mxu0 0.0
    %132 = vmatprep.subr.mxu0 0.0
    %133 = vmatpush2.msra.mxu0 0.0
    %134 = vmatprep.mubr.f32.mxu0 0.0
    %135 = vmatmul.mubr.f32.gmra.mxu0 %v64
    %v136 = vpop.f32.mrf.mxu0
    %v137 = vadd.f32 %v61, %v136
    %v138 = vpop.f32.mrf.mxu0
    %139 = vdwg.mxu0
    %vm140 = vcmask 32768
    %141 = vst.msk [vmem:[#allocation8] sm:$0x1] %vm140, %v137
    %v142 = vld [vmem:[#allocation7] sm:$0x1f]
    %v143 = vld [vmem:[#allocation2] sm:$0x1]
    %v144 = vld [vmem:[#allocation8] sm:$0x1]
    %v146 = vsel %vm62, %v143, 0
    %v149 = vsel %vm66, %v142, 0
    %151 = vmatprep.subr.mxu0 0.0
    %152 = vmatpush1.msra.mxu0 0.0
    %153 = vmatprep.subr.mxu0 0.0
    %154 = vmatpush1.msra.mxu0 0.0
    %155 = vmatprep.subr.mxu0 0.0
    %156 = vmatpush1.msra.mxu0 0.0
    %157 = vmatprep.subr.mxu0 0.0
    %158 = vmatpush1.msra.mxu0 0.0
    %159 = vmatprep.subr.mxu0 0.0
    %160 = vmatpush1.msra.mxu0 0.0
    %161 = vmatprep.subr.mxu0 0.0
    %162 = vmatpush1.msra.mxu0 0.0
    %163 = vmatprep.subr.mxu0 0.0
    %164 = vmatpush1.msra.mxu0 0.0
    %165 = vmatprep.subr.mxu0 0.0
    %166 = vmatpush1.msra.mxu0 0.0
    %167 = vmatprep.subr.mxu0 0.0
    %168 = vmatpush1.msra.mxu0 0.0
    %169 = vmatprep.subr.mxu0 0.0
    %170 = vmatpush1.msra.mxu0 0.0
    %171 = vmatprep.subr.mxu0 0.0
    %172 = vmatpush1.msra.mxu0 0.0
    %173 = vmatprep.subr.mxu0 0.0
    %174 = vmatpush1.msra.mxu0 0.0
    %175 = vmatprep.subr.mxu0 0.0
    %176 = vmatpush1.msra.mxu0 0.0
    %177 = vmatprep.subr.mxu0 0.0
    %178 = vmatpush1.msra.mxu0 0.0
    %179 = vmatprep.subr.mxu0 0.0
    %180 = vmatpush1.msra.mxu0 0.0
    %181 = vmatprep.subr.mxu0 0.0
    %182 = vmatpush1.msra.mxu0 %v149
    %183 = vmatprep.subr.mxu0 0.0
    %184 = vmatpush2.msra.mxu0 0.0
    %185 = vmatprep.subr.mxu0 0.0
    %186 = vmatpush2.msra.mxu0 0.0
    %187 = vmatprep.subr.mxu0 0.0
    %188 = vmatpush2.msra.mxu0 0.0
    %189 = vmatprep.subr.mxu0 0.0
    %190 = vmatpush2.msra.mxu0 0.0
    %191 = vmatprep.subr.mxu0 0.0
    %192 = vmatpush2.msra.mxu0 0.0
    %193 = vmatprep.subr.mxu0 0.0
    %194 = vmatpush2.msra.mxu0 0.0
    %195 = vmatprep.subr.mxu0 0.0
    %196 = vmatpush2.msra.mxu0 0.0
    %197 = vmatprep.subr.mxu0 0.0
    %198 = vmatpush2.msra.mxu0 0.0
    %199 = vmatprep.subr.mxu0 0.0
    %200 = vmatpush2.msra.mxu0 0.0
    %201 = vmatprep.subr.mxu0 0.0
    %202 = vmatpush2.msra.mxu0 0.0
    %203 = vmatprep.subr.mxu0 0.0
    %204 = vmatpush2.msra.mxu0 0.0
    %205 = vmatprep.subr.mxu0 0.0
    %206 = vmatpush2.msra.mxu0 0.0
    %207 = vmatprep.subr.mxu0 0.0
    %208 = vmatpush2.msra.mxu0 0.0
    %209 = vmatprep.subr.mxu0 0.0
    %210 = vmatpush2.msra.mxu0 0.0
    %211 = vmatprep.subr.mxu0 0.0
    %212 = vmatpush2.msra.mxu0 0.0
    %213 = vmatprep.subr.mxu0 0.0
    %214 = vmatpush2.msra.mxu0 0.0
    %215 = vmatprep.mubr.f32.mxu0 0.0
    %216 = vmatmul.mubr.f32.gmra.mxu0 %v146
    %v217 = vpop.f32.mrf.mxu0
    %v218 = vadd.f32 0.0, %v217
    %v219 = vpop.f32.mrf.mxu0
    %220 = vdwg.mxu0
    %v221 = vadd.f32 %v144, %v218
    %v222 = vtanh.pop %v221
    %223 = vst.msk [vmem:[#allocation8] sm:$0x1] %vm140, %v222
    %224 = vst.msk [vmem:[#allocation9] sm:$0x1] %vm140, %v222
    // Predicated region
    $region34: #{model_forward.1} parent=1 // pred_check
      _
    $region35: #{model_forward.1} parent=1 // pred_check_branch
      %226 = sbr.rel (0) target = $region37
    $region36: #{model_forward.1} parent=1 // pred_region
      %s228 = ssub.s32 16, 16
      %229 = vsyncadd [#allocation4], %s228
      %s231 = sshll.u32 [#allocation8], 4
      %s232 = int_to_ptr.vmem [resolvable:$true] %s231
      %234 = dma.vmem_to_hbm [thread:$0]  %s232, 16, %s5, [#allocation4]
    $region37: #{model_forward.1} parent=1 // pred_fallthru
      _
    // Predicated region
    $region38: #{model_forward.1} parent=1 // pred_check
      _
    $region39: #{model_forward.1} parent=1 // pred_check_branch
      %236 = sbr.rel (0) target = $region41
    $region40: #{model_forward.1} parent=1 // pred_region
      %s238 = ssub.s32 16, 16
      %239 = vsyncadd [#allocation10], %s238
      %s241 = sshll.u32 [#allocation9], 4
      %s242 = int_to_ptr.vmem [resolvable:$true] %s241
      %244 = dma.vmem_to_hbm [thread:$0]  %s242, 16, %s6, [#allocation10]
    $region41: #{model_forward.1} parent=1 // pred_fallthru
      _
    // Predicated region
    $region42: #{model_forward.1} parent=1 // pred_check
      _
    $region43: #{model_forward.1} parent=1 // pred_check_branch
      %246 = sbr.rel (0) target = $region45
    $region44: #{model_forward.1} parent=1 // pred_region
      %247 = dma.done [#allocation4], 16
    $region45: #{model_forward.1} parent=1 // pred_fallthru
      _
    // Predicated region
    $region46: #{model_forward.1} parent=1 // pred_check
      _
    $region47: #{model_forward.1} parent=1 // pred_check_branch
      %249 = sbr.rel (0) target = $region49
    $region48: #{model_forward.1} parent=1 // pred_region
      %250 = dma.done [#allocation10], 16
    $region49: #{model_forward.1} parent=1 // pred_fallthru
      _
    %251 = vsyncpa [#allocation3], 1
    %252 = vsyncpa [#allocation6], 1
    %253 = vsyncpa [#allocation4], 1
    %254 = vsyncpa [#allocation10], 1

</llo_original>
